<compile_context>
chip_gen: v5e
topology: v5e:2x2
jax: 0.10.0
libtpu: 0.0.40
codegen_flags: <defaults>
</compile_context>

<pallas_src>
import functools

import jax
import jax.numpy as jnp
from jax.experimental import pallas as pl
from jax.experimental.pallas import tpu as pltpu


_LANE = 128
_SUBLANE = 8


def _round_up(x, m):
    return (x + m - 1) // m * m


def _vmem_capacity_bytes():
    """Per-core VMEM capacity; conservative v7x default if the query fails."""
    try:
        info = pltpu.get_tpu_info()
        cap = getattr(info, "vmem_capacity_bytes", None)
        if cap:
            return int(cap)
    except Exception:
        pass
    return 64 * 1024 * 1024


def _estimate_vmem_bytes(tm, hp, fp, itemsize, single_buffer_weights):
    w_bufs = 1 if single_buffer_weights else 2
    weights = w_bufs * (hp * fp + fp + fp * hp + hp) * itemsize
    io_tiles = 2 * 2 * tm * hp * itemsize   # x + out tiles, double-buffered
    intermediate = tm * fp * 4              # f32 fc1 / GELU activation
    return weights + io_tiles + intermediate


def _pick_tile_m(m, hp, fp, itemsize, tile_m, vmem_budget, single_buffer_weights):
    """Row tile: as large as fits the VMEM budget, multiple of the sublane."""
    tm = min(_round_up(tile_m, _SUBLANE), _round_up(m, _SUBLANE))
    while (tm > _SUBLANE and
           _estimate_vmem_bytes(tm, hp, fp, itemsize,
                                single_buffer_weights) > vmem_budget):
        tm = _round_up(max(_SUBLANE, tm // 2), _SUBLANE)
    # Keep >= 2 grid steps when there is enough work so the "parallel" row axis
    # can shard across both TensorCores on v7x (negligible cost elsewhere).
    if m > _SUBLANE and pl.cdiv(m, tm) < 2:
        tm = max(_SUBLANE, _round_up(pl.cdiv(m, 2), _SUBLANE))
    return tm


def _mlp_kernel(x_ref, w1_ref, b1_ref, w2_ref, b2_ref, o_ref, *, use_tanh_gelu):
    # x_ref: (tm, Hp); w1_ref: (Hp, Fp); b1_ref: (1, Fp); w2_ref: (Fp, Hp);
    # b2_ref: (1, Hp); o_ref: (tm, Hp)
    x = x_ref[...]
    # fc1 on the MXU with f32 accumulation, plus bias.
    h = jnp.dot(x, w1_ref[...], preferred_element_type=jnp.float32) + b1_ref[...]
    if use_tanh_gelu:
        # tanh approximation (EUP path); small documented deviation from torch
        # exact GELU.  Enable only if profiling shows the erf poly is VALU-bound.
        h = 0.5 * h * (1.0 + jnp.tanh(
            jnp.float32(0.7978845608028654) * (h + jnp.float32(0.044715) * h * h * h)))
    else:
        # Exact GELU (torch.nn.GELU default): 0.5*x*(1+erf(x/sqrt(2))).
        h = 0.5 * h * (1.0 + jax.lax.erf(h * jnp.float32(0.7071067811865476)))
    # TODO(synk): dropout omitted (identity in inference mode).
    # fc2 on the MXU with f32 accumulation, plus bias.  Cast the activation back
    # to the input dtype first so a bf16 model matches the PyTorch bf16 forward.
    o = jnp.dot(h.astype(x.dtype), w2_ref[...],
                preferred_element_type=jnp.float32) + b2_ref[...]
    o_ref[...] = o.astype(o_ref.dtype)


@functools.partial(
    jax.jit,
    static_argnames=("tile_m", "single_buffer_weights", "use_tanh_gelu",
                     "vmem_limit_bytes"))
def _mlp_pallas(x, w1, b1, w2, b2, *, tile_m, single_buffer_weights,
                use_tanh_gelu, vmem_limit_bytes):
    mp, hp = x.shape
    fp = w1.shape[1]
    grid_m = pl.cdiv(mp, tile_m)   # ragged last tile handled by Pallas masking

    def const_spec(shape):
        # Grid-invariant operand: fetched once; single-buffer when supported.
        if single_buffer_weights:
            return pl.BlockSpec(shape, lambda i: (0, 0),
                                pipeline_mode=pl.Buffered(1))
        return pl.BlockSpec(shape, lambda i: (0, 0))

    isz = x.dtype.itemsize
    cost = pl.CostEstimate(
        flops=4 * mp * hp * fp,                      # two (M,H)x(H,F) matmuls
        transcendentals=mp * fp,                     # erf/tanh per fc1 activation
        bytes_accessed=(2 * mp * hp * isz            # x in + out
                        + (hp * fp + fp + fp * hp + hp) * isz),
    )

    kernel = functools.partial(_mlp_kernel, use_tanh_gelu=use_tanh_gelu)

    return pl.pallas_call(
        kernel,
        out_shape=jax.ShapeDtypeStruct((mp, hp), x.dtype),
        grid_spec=pltpu.PrefetchScalarGridSpec(
            num_scalar_prefetch=0,
            grid=(grid_m,),
            in_specs=[
                pl.BlockSpec((tile_m, hp), lambda i: (i, 0)),   # x row tile
                const_spec((hp, fp)),                           # W1 (resident)
                const_spec((1, fp)),                            # b1
                const_spec((fp, hp)),                           # W2 (resident)
                const_spec((1, hp)),                            # b2
            ],
            out_specs=pl.BlockSpec((tile_m, hp), lambda i: (i, 0)),
        ),
        compiler_params=pltpu.CompilerParams(
            dimension_semantics=("parallel",),
            vmem_limit_bytes=vmem_limit_bytes,
        ),
        cost_estimate=cost,
    )(x, w1, b1, w2, b2)


def mgpstr_mlp(hidden_states, w1, b1, w2, b2, *, tile_m=None,
               compute_dtype=None, use_tanh_gelu=False):
    """MgpstrMlp forward.

    hidden_states: (B, S, H); w1: (H, F); b1: (F,); w2: (F, H); b2: (H,).
    compute_dtype: optional (e.g. jnp.bfloat16) to run the MXU at full rate on
      v6e/v7x while accumulating in f32; output is cast back to the input dtype.
    """
    B, S, H = hidden_states.shape
    F = w1.shape[1]
    M = B * S

    # Lane-dense padding of the hidden dims (exact: zero pad contributes 0).
    # Real MgpstrMlp sizes (H=768, F=3072) are already aligned -> no pad ops.
    Hp = _round_up(H, _LANE)
    Fp = _round_up(F, _LANE)
    Mp = _round_up(M, _SUBLANE)   # sublane-only rounding; no tile-sized pad

    # Generation-aware VMEM sizing (v5e/v6e: 128 MiB; v7x: 64 MiB per TC).
    cap = _vmem_capacity_bytes()
    vmem_budget = cap * 5 // 8          # ~80 MiB on 128-MiB chips, ~40 on v7x
    vmem_limit = cap * 3 // 4           # ~96 MiB / ~48 MiB scoped limit
    if tile_m is None:
        tile_m = 512 if cap >= (100 << 20) else 256

    x = hidden_states.reshape(M, H)
    if compute_dtype is not None and x.dtype != jnp.dtype(compute_dtype):
        x = x.astype(compute_dtype)
        w1 = w1.astype(compute_dtype)
        b1 = b1.astype(compute_dtype)
        w2 = w2.astype(compute_dtype)
        b2 = b2.astype(compute_dtype)

    isz = jnp.dtype(x.dtype).itemsize
    tm = _pick_tile_m(Mp, Hp, Fp, isz, tile_m, vmem_budget,
                      single_buffer_weights=True)

    # Guarded padding: skipped entirely when shapes are already aligned.
    if Mp != M or Hp != H:
        x = jnp.pad(x, ((0, Mp - M), (0, Hp - H)))
    if Hp != H or Fp != F:
        w1 = jnp.pad(w1, ((0, Hp - H), (0, Fp - F)))
        w2 = jnp.pad(w2, ((0, Fp - F), (0, Hp - H)))
    if Fp != F:
        b1 = jnp.pad(b1, ((0, Fp - F),))
    if Hp != H:
        b2 = jnp.pad(b2, ((0, Hp - H),))
    b1 = b1.reshape(1, Fp)
    b2 = b2.reshape(1, Hp)

    try:
        out = _mlp_pallas(x, w1, b1, w2, b2, tile_m=tm,
                          single_buffer_weights=True,
                          use_tanh_gelu=use_tanh_gelu,
                          vmem_limit_bytes=vmem_limit)
    except (TypeError, ValueError, NotImplementedError):
        # Fallback for jax versions without BlockSpec(pipeline_mode=Buffered(1)).
        # Re-derive the row tile assuming double-buffered weights so the retry
        # stays inside the scoped VMEM limit.
        tm2 = _pick_tile_m(Mp, Hp, Fp, isz, tile_m, vmem_budget,
                           single_buffer_weights=False)
        out = _mlp_pallas(x, w1, b1, w2, b2, tile_m=tm2,
                          single_buffer_weights=False,
                          use_tanh_gelu=use_tanh_gelu,
                          vmem_limit_bytes=vmem_limit)

    if Mp != M or Hp != H:
        out = out[:M, :H]
    out = out.reshape(B, S, H)
    if out.dtype != hidden_states.dtype:
        out = out.astype(hidden_states.dtype)
    return out


def _reference_mlp(x, w1, b1, w2, b2):
    h = x @ w1 + b1
    h = 0.5 * h * (1.0 + jax.lax.erf(h / jnp.sqrt(2.0)))
    return h @ w2 + b2


if __name__ == "__main__":
    # Small config consistent with MgpstrMlp: hidden_size=32, hidden_features=64.
    batch, seq, hidden_size, hidden_features = 2, 8, 32, 64

    key = jax.random.PRNGKey(0)
    k_x, k_w1, k_b1, k_w2, k_b2 = jax.random.split(key, 5)

    x = jax.random.normal(k_x, (batch, seq, hidden_size), dtype=jnp.float32)
    # Deterministic synthetic parameters (shapes from nn.Linear in __init__).
    w1 = 0.02 * jax.random.normal(k_w1, (hidden_size, hidden_features), jnp.float32)
    b1 = 0.02 * jax.random.normal(k_b1, (hidden_features,), jnp.float32)
    w2 = 0.02 * jax.random.normal(k_w2, (hidden_features, hidden_size), jnp.float32)
    b2 = 0.02 * jax.random.normal(k_b2, (hidden_size,), jnp.float32)

    out = mgpstr_mlp(x, w1, b1, w2, b2)
    out = jax.block_until_ready(out)

    ref = _reference_mlp(x.reshape(-1, hidden_size), w1, b1, w2, b2).reshape(
        batch, seq, hidden_size
    )
    assert out.shape == (batch, seq, hidden_size)
    assert jnp.allclose(out, ref, atol=1e-5, rtol=1e-5), "mismatch vs reference"

    print("KERNEL_OK")
</pallas_src>

<mosaic_0001>
module attributes {stable_mosaic.version = 11 : i64} {
  func.func @_mlp_kernel(%arg0: i32, %arg1: memref<8x128xf32, #tpu.memory_space<vmem>>, %arg2: memref<128x128xf32, #tpu.memory_space<vmem>>, %arg3: memref<1x128xf32, #tpu.memory_space<vmem>>, %arg4: memref<128x128xf32, #tpu.memory_space<vmem>>, %arg5: memref<1x128xf32, #tpu.memory_space<vmem>>, %arg6: memref<8x128xf32, #tpu.memory_space<vmem>>) attributes {dimension_semantics = [#tpu.dimension_semantics<parallel>], iteration_bounds = array<i64: 2>, scalar_prefetch = 0 : i64, scratch_operands = 0 : i64, tpu.core_type = #tpu.core_type<tc>, window_params = [{transform_indices = @transform_0, window_bounds = array<i64: 8, 128>}, {pipeline_mode = #tpu.pipeline_mode<synchronous>, transform_indices = @transform_1, window_bounds = array<i64: 128, 128>}, {pipeline_mode = #tpu.pipeline_mode<synchronous>, transform_indices = @transform_2, window_bounds = array<i64: 1, 128>}, {pipeline_mode = #tpu.pipeline_mode<synchronous>, transform_indices = @transform_3, window_bounds = array<i64: 128, 128>}, {pipeline_mode = #tpu.pipeline_mode<synchronous>, transform_indices = @transform_4, window_bounds = array<i64: 1, 128>}, {transform_indices = @transform_5, window_bounds = array<i64: 8, 128>}]} {
    %c0 = arith.constant 0 : index
    %c0_0 = arith.constant 0 : index
    %0 = vector.load %arg1[%c0, %c0_0] : memref<8x128xf32, #tpu.memory_space<vmem>>, vector<8x128xf32>
    %c0_1 = arith.constant 0 : index
    %c0_2 = arith.constant 0 : index
    %1 = vector.load %arg2[%c0_1, %c0_2] : memref<128x128xf32, #tpu.memory_space<vmem>>, vector<128x128xf32>
    %cst = arith.constant dense<0.000000e+00> : vector<8x128xf32>
    %2 = tpu.matmul %0, %1, %cst {dimension_numbers = #tpu.dot_dimension_numbers<[1], [0], [0], [1], [0, 0, 1, 1], [], []>} : vector<8x128xf32>, vector<128x128xf32>, vector<8x128xf32> -> vector<8x128xf32>
    %c0_3 = arith.constant 0 : index
    %c0_4 = arith.constant 0 : index
    %3 = vector.load %arg3[%c0_3, %c0_4] : memref<1x128xf32, #tpu.memory_space<vmem>>, vector<1x128xf32>
    %4 = vector.broadcast %3 : vector<1x128xf32> to vector<8x128xf32>
    %5 = arith.addf %2, %4 : vector<8x128xf32>
    %cst_5 = arith.constant 5.000000e-01 : f32
    %6 = vector.broadcast %cst_5 : f32 to vector<8x128xf32>
    %7 = arith.mulf %6, %5 : vector<8x128xf32>
    %cst_6 = arith.constant 0.707106769 : f32
    %8 = vector.broadcast %cst_6 : f32 to vector<8x128xf32>
    %9 = arith.mulf %5, %8 : vector<8x128xf32>
    %10 = math.erf %9 : vector<8x128xf32>
    %cst_7 = arith.constant 1.000000e+00 : f32
    %11 = vector.broadcast %cst_7 : f32 to vector<8x128xf32>
    %12 = arith.addf %11, %10 : vector<8x128xf32>
    %13 = arith.mulf %7, %12 : vector<8x128xf32>
    %c0_8 = arith.constant 0 : index
    %c0_9 = arith.constant 0 : index
    %14 = vector.load %arg4[%c0_8, %c0_9] : memref<128x128xf32, #tpu.memory_space<vmem>>, vector<128x128xf32>
    %cst_10 = arith.constant dense<0.000000e+00> : vector<8x128xf32>
    %15 = tpu.matmul %13, %14, %cst_10 {dimension_numbers = #tpu.dot_dimension_numbers<[1], [0], [0], [1], [0, 0, 1, 1], [], []>} : vector<8x128xf32>, vector<128x128xf32>, vector<8x128xf32> -> vector<8x128xf32>
    %c0_11 = arith.constant 0 : index
    %c0_12 = arith.constant 0 : index
    %16 = vector.load %arg5[%c0_11, %c0_12] : memref<1x128xf32, #tpu.memory_space<vmem>>, vector<1x128xf32>
    %17 = vector.broadcast %16 : vector<1x128xf32> to vector<8x128xf32>
    %18 = arith.addf %15, %17 : vector<8x128xf32>
    %c0_13 = arith.constant 0 : index
    %c0_14 = arith.constant 0 : index
    %19 = vector.load %arg6[%c0_13, %c0_14] : memref<8x128xf32, #tpu.memory_space<vmem>>, vector<8x128xf32>
    tpu.vector_store %arg6[%c0_13, %c0_14], %18 {strides = array<i32>} : memref<8x128xf32, #tpu.memory_space<vmem>>, vector<8x128xf32>,
    return
  }
  func.func @transform_0(%arg0: i32) -> (i32, i32) {
    %c0_i32 = arith.constant 0 : i32
    %c0_i32_0 = arith.constant 0 : i32
    return %arg0, %c0_i32 : i32, i32
  }
  func.func @transform_1(%arg0: i32) -> (i32, i32) {
    %c0_i32 = arith.constant 0 : i32
    %c0_i32_0 = arith.constant 0 : i32
    %c0_i32_1 = arith.constant 0 : i32
    return %c0_i32, %c0_i32_0 : i32, i32
  }
  func.func @transform_2(%arg0: i32) -> (i32, i32) {
    %c0_i32 = arith.constant 0 : i32
    %c0_i32_0 = arith.constant 0 : i32
    %c0_i32_1 = arith.constant 0 : i32
    return %c0_i32, %c0_i32_0 : i32, i32
  }
  func.func @transform_3(%arg0: i32) -> (i32, i32) {
    %c0_i32 = arith.constant 0 : i32
    %c0_i32_0 = arith.constant 0 : i32
    %c0_i32_1 = arith.constant 0 : i32
    return %c0_i32, %c0_i32_0 : i32, i32
  }
  func.func @transform_4(%arg0: i32) -> (i32, i32) {
    %c0_i32 = arith.constant 0 : i32
    %c0_i32_0 = arith.constant 0 : i32
    %c0_i32_1 = arith.constant 0 : i32
    return %c0_i32, %c0_i32_0 : i32, i32
  }
  func.func @transform_5(%arg0: i32) -> (i32, i32) {
    %c0_i32 = arith.constant 0 : i32
    %c0_i32_0 = arith.constant 0 : i32
    return %arg0, %c0_i32 : i32, i32
  }
}

</mosaic_0001>

<llo_original>
// kernel: _mlp_pallas.1
$region0: #{_mlp_pallas.1}
  #allocation0 [shape = 'u32[]', space=smem, size = 0x4, offset = 0x4, fixed_abs, tag = 'smem constant byte address 0x4 - core index']
  #allocation1 [shape = 'u32[72,128]{1,0:T(1,128)}', space=vmem, size = 0x9000, scoped, tag = 'internal scratch']
  %s0 = inlined_call_operand.hbm [shape: f32[16,128], index: 0, kind: input, shape index: {}]
  %s1 = inlined_call_operand.hbm [shape: f32[128,128], index: 1, kind: input, shape index: {}]
  %s2 = inlined_call_operand.vmem [shape: f32[1,128], index: 2, kind: input, shape index: {}]
  %s3 = inlined_call_operand.hbm [shape: f32[128,128], index: 3, kind: input, shape index: {}]
  %s4 = inlined_call_operand.vmem [shape: f32[1,128], index: 4, kind: input, shape index: {}]
  %s5 = inlined_call_operand.hbm [shape: f32[16,128], index: 5, kind: output, shape index: {}]
  %s6 = sld [smem:[#allocation0]]
  $region65: #{_mlp_pallas.1} parent=0
    _
  %s8 = ssub.s32 1, %s6
  %s9 = scalar_select 0, %s8, %s6
  $region1: #{_mlp_pallas.1} parent=0
    #allocation2 [shape = 'u8[8192]{0}', space=vmem, size = 0x2000, scoped, tag = 'input window, operand 0']
    #allocation3 [shape = 's32[2]{0}', space=sflag, size = 0x8, scoped, tag = 'scoped memory for _mlp_pallas.1']
    #allocation4 [shape = 's32[2]{0}', space=sflag, size = 0x8, scoped, tag = 'scoped memory for _mlp_pallas.1']
    #allocation5 [shape = 'u8[65536]{0}', space=vmem, size = 0x10000, scoped, tag = 'input window, operand 1, single buffered']
    #allocation6 [shape = 's32[1]{0}', space=sflag, size = 0x4, scoped, tag = 'scoped memory for _mlp_pallas.1']
    #allocation7 [shape = 'u8[65536]{0}', space=vmem, size = 0x10000, scoped, tag = 'input window, operand 3, single buffered']
    #allocation8 [shape = 'u8[8192]{0}', space=vmem, size = 0x2000, scoped, tag = 'output window, operand 0']
    %10 = vsyncpa [#allocation3], 0
    %s11 = scalar_lea.sflag [#allocation3], 1
    %12 = vsyncpa %s11, 0
    %13 = vsyncpa [#allocation6], 0
    %14 = vsyncpa [#allocation4], 0
    %s15 = scalar_lea.sflag [#allocation4], 1
    %16 = vsyncpa %s15, 0
    loop: start=0, step=1, limit=4
    $region2: #{_mlp_pallas.1} parent=1 // loop_pre_header
      _
    $region3: #{_mlp_pallas.1} parent=1 // loop_header
      %s18 = sphi 0, %s22
      %p19 = scmp.ge.s32.totalorder %s18, 4
      %s28 = sphi 0, %s30
      %s31 = sphi 0, %s28
      %s32 = sphi 0, %s31
      %s48 = sphi 0, %s32
      %s52 = sphi 0, %s52
      %s54 = sphi 0, %s52
      %s55 = sphi 0, %s54
      %s69 = sphi 0, %s55
      %s73 = sphi 0, %s73
      %s75 = sphi 0, %s73
      %s76 = sphi 0, %s75
      %s90 = sphi 0, %s76
      %s94 = sphi 0, %s94
      %s96 = sphi 0, %s94
      %s97 = sphi 0, %s96
      %s111 = sphi 0, %s97
      %s115 = sphi 0, %s115
      %s117 = sphi 0, %s115
      %s118 = sphi 0, %s117
      %s132 = sphi 0, %s118
      %s138 = sphi 0, %s140
      %s141 = sphi 0, %s138
      %s142 = sphi 0, %s141
      %s158 = sphi 0, %s142
    $region4: #{_mlp_pallas.1} parent=1 // loop_header_branch
      %21 = sbr.rel (%p19) target = $region8
    $region5: #{_mlp_pallas.1} parent=1 // loop_body
      %s23 = ssub.s32 %s18, 1
      %s24 = ssub.s32 %s18, 2
      %s25 = sadd.s32 %s18, 1
      %s26 = ssub.s32 %s18, %s25
      %p27 = scmp.eq.s32.totalorder %s26, 0
      %s29 = sadd.s32 %s28, 1
      %s30 = scalar_select %p27, %s28, %s29
      %p33 = pneg %p27
      %p34 = scmp.eq.s32.totalorder %s18, 1
      %p35 = por %p33, %p34
      %p36 = scmp.ne.s32.totalorder %s28, %s31
      %p37 = scmp.eq.s32.totalorder %s18, 0
      %p38 = por %p36, %p37
      %p39 = scmp.ne.s32.totalorder %s28, %s31
      %p40 = scmp.eq.s32.totalorder %s23, 1
      %p41 = por %p39, %p40
      %p42 = scmp.ne.s32.totalorder %s31, %s32
      %p43 = scmp.eq.s32.totalorder %s23, 0
      %p44 = por %p42, %p43
      %p45 = scmp.ne.s32.totalorder %s31, %s32
      %p46 = scmp.eq.s32.totalorder %s24, 1
      %p47 = por %p45, %p46
      %p49 = scmp.ne.s32.totalorder %s32, %s48
      %p50 = scmp.eq.s32.totalorder %s24, 0
      %p51 = por %p49, %p50
      %s53 = sadd.s32 %s52, 1
      %p56 = scmp.eq.s32.totalorder %s18, 1
      %p57 = scmp.ne.s32.totalorder %s52, %s54
      %p58 = scmp.eq.s32.totalorder %s18, 0
      %p59 = por %p57, %p58
      %p60 = scmp.ne.s32.totalorder %s52, %s54
      %p61 = scmp.eq.s32.totalorder %s23, 1
      %p62 = por %p60, %p61
      %p63 = scmp.ne.s32.totalorder %s54, %s55
      %p64 = scmp.eq.s32.totalorder %s23, 0
      %p65 = por %p63, %p64
      %p66 = scmp.ne.s32.totalorder %s54, %s55
      %p67 = scmp.eq.s32.totalorder %s24, 1
      %p68 = por %p66, %p67
      %p70 = scmp.ne.s32.totalorder %s55, %s69
      %p71 = scmp.eq.s32.totalorder %s24, 0
      %p72 = por %p70, %p71
      %s74 = sadd.s32 %s73, 1
      %p77 = scmp.eq.s32.totalorder %s18, 1
      %p78 = scmp.ne.s32.totalorder %s73, %s75
      %p79 = scmp.eq.s32.totalorder %s18, 0
      %p80 = por %p78, %p79
      %p81 = scmp.ne.s32.totalorder %s73, %s75
      %p82 = scmp.eq.s32.totalorder %s23, 1
      %p83 = por %p81, %p82
      %p84 = scmp.ne.s32.totalorder %s75, %s76
      %p85 = scmp.eq.s32.totalorder %s23, 0
      %p86 = por %p84, %p85
      %p87 = scmp.ne.s32.totalorder %s75, %s76
      %p88 = scmp.eq.s32.totalorder %s24, 1
      %p89 = por %p87, %p88
      %p91 = scmp.ne.s32.totalorder %s76, %s90
      %p92 = scmp.eq.s32.totalorder %s24, 0
      %p93 = por %p91, %p92
      %s95 = sadd.s32 %s94, 1
      %p98 = scmp.eq.s32.totalorder %s18, 1
      %p99 = scmp.ne.s32.totalorder %s94, %s96
      %p100 = scmp.eq.s32.totalorder %s18, 0
      %p101 = por %p99, %p100
      %p102 = scmp.ne.s32.totalorder %s94, %s96
      %p103 = scmp.eq.s32.totalorder %s23, 1
      %p104 = por %p102, %p103
      %p105 = scmp.ne.s32.totalorder %s96, %s97
      %p106 = scmp.eq.s32.totalorder %s23, 0
      %p107 = por %p105, %p106
      %p108 = scmp.ne.s32.totalorder %s96, %s97
      %p109 = scmp.eq.s32.totalorder %s24, 1
      %p110 = por %p108, %p109
      %p112 = scmp.ne.s32.totalorder %s97, %s111
      %p113 = scmp.eq.s32.totalorder %s24, 0
      %p114 = por %p112, %p113
      %s116 = sadd.s32 %s115, 1
      %p119 = scmp.eq.s32.totalorder %s18, 1
      %p120 = scmp.ne.s32.totalorder %s115, %s117
      %p121 = scmp.eq.s32.totalorder %s18, 0
      %p122 = por %p120, %p121
      %p123 = scmp.ne.s32.totalorder %s115, %s117
      %p124 = scmp.eq.s32.totalorder %s23, 1
      %p125 = por %p123, %p124
      %p126 = scmp.ne.s32.totalorder %s117, %s118
      %p127 = scmp.eq.s32.totalorder %s23, 0
      %p128 = por %p126, %p127
      %p129 = scmp.ne.s32.totalorder %s117, %s118
      %p130 = scmp.eq.s32.totalorder %s24, 1
      %p131 = por %p129, %p130
      %p133 = scmp.ne.s32.totalorder %s118, %s132
      %p134 = scmp.eq.s32.totalorder %s24, 0
      %p135 = por %p133, %p134
      %s136 = ssub.s32 %s18, %s25
      %p137 = scmp.eq.s32.totalorder %s136, 0
      %s139 = sadd.s32 %s138, 1
      %s140 = scalar_select %p137, %s138, %s139
      %p143 = pneg %p137
      %p144 = scmp.eq.s32.totalorder %s18, 1
      %p145 = por %p143, %p144
      %p146 = scmp.ne.s32.totalorder %s138, %s141
      %p147 = scmp.eq.s32.totalorder %s18, 0
      %p148 = por %p146, %p147
      %p149 = scmp.ne.s32.totalorder %s138, %s141
      %p150 = scmp.eq.s32.totalorder %s23, 1
      %p151 = por %p149, %p150
      %p152 = scmp.ne.s32.totalorder %s141, %s142
      %p153 = scmp.eq.s32.totalorder %s23, 0
      %p154 = por %p152, %p153
      %p155 = scmp.ne.s32.totalorder %s141, %s142
      %p156 = scmp.eq.s32.totalorder %s24, 1
      %p157 = por %p155, %p156
      %p159 = scmp.ne.s32.totalorder %s142, %s158
      %p160 = scmp.eq.s32.totalorder %s24, 0
      %p161 = por %p159, %p160
      %p162 = scmp.le.s32.totalorder 1, %s18
      %p163 = scmp.lt.s32.totalorder %s18, 3
      %p164 = pnand %p162, %p163
      %p165 = pneg %p164
      // Predicated region
      $region9: #{_mlp_pallas.1} parent=5 // pred_check
        _
      $region10: #{_mlp_pallas.1} parent=5 // pred_check_branch
        %167 = sbr.rel (%p164) target = $region12
      $region11: #{_mlp_pallas.1} parent=5 // pred_region
        %s168 = ssub.s32 %s18, 1
        // Predicated region
        $region13: #{_mlp_pallas.1} parent=11 // pred_check
          %p169 = pneg %p65
        $region14: #{_mlp_pallas.1} parent=11 // pred_check_branch
          %171 = sbr.rel (%p169) target = $region16
        $region15: #{_mlp_pallas.1} parent=11 // pred_region
          %173 = vsyncadd [#allocation6], 0
          %s174 = sshll.u32 %s1, 4
          %s175 = int_to_ptr.hbm [resolvable:$true] %s174
          %s176 = sshll.u32 [#allocation5], 4
          %s177 = int_to_ptr.vmem [resolvable:$true] %s176
          %182 = dma.hbm_to_vmem [thread:$0]  %s175, 2048, %s177, [#allocation6], 128, 128, 8
        $region16: #{_mlp_pallas.1} parent=11 // pred_fallthru
          _
        // Predicated region
        $region17: #{_mlp_pallas.1} parent=11 // pred_check
          %p183 = pneg %p86
        $region18: #{_mlp_pallas.1} parent=11 // pred_check_branch
          %185 = sbr.rel (%p183) target = $region20
        $region19: #{_mlp_pallas.1} parent=11 // pred_region
          _
        $region20: #{_mlp_pallas.1} parent=11 // pred_fallthru
          _
        // Predicated region
        $region21: #{_mlp_pallas.1} parent=11 // pred_check
          %p186 = pneg %p107
        $region22: #{_mlp_pallas.1} parent=11 // pred_check_branch
          %188 = sbr.rel (%p186) target = $region24
        $region23: #{_mlp_pallas.1} parent=11 // pred_region
          %190 = vsyncadd [#allocation6], 0
          %s191 = sshll.u32 %s3, 4
          %s192 = int_to_ptr.hbm [resolvable:$true] %s191
          %s193 = sshll.u32 [#allocation7], 4
          %s194 = int_to_ptr.vmem [resolvable:$true] %s193
          %199 = dma.hbm_to_vmem [thread:$0]  %s192, 2048, %s194, [#allocation6], 128, 128, 8
        $region24: #{_mlp_pallas.1} parent=11 // pred_fallthru
          _
        // Predicated region
        $region25: #{_mlp_pallas.1} parent=11 // pred_check
          %p200 = pneg %p128
        $region26: #{_mlp_pallas.1} parent=11 // pred_check_branch
          %202 = sbr.rel (%p200) target = $region28
        $region27: #{_mlp_pallas.1} parent=11 // pred_region
          _
        $region28: #{_mlp_pallas.1} parent=11 // pred_fallthru
          _
      $region12: #{_mlp_pallas.1} parent=5 // pred_fallthru
        _
      %p203 = scmp.lt.s32.totalorder %s18, 2
      // Predicated region
      $region29: #{_mlp_pallas.1} parent=5 // pred_check
        %p204 = pneg %p203
      $region30: #{_mlp_pallas.1} parent=5 // pred_check_branch
        %206 = sbr.rel (%p204) target = $region32
      $region31: #{_mlp_pallas.1} parent=5 // pred_region
        // Predicated region
        $region33: #{_mlp_pallas.1} parent=31 // pred_check
          %p207 = pneg %p38
        $region34: #{_mlp_pallas.1} parent=31 // pred_check_branch
          %209 = sbr.rel (%p207) target = $region36
        $region35: #{_mlp_pallas.1} parent=31 // pred_region
          %s210 = sand.u32 %s28, 1
          %s211 = scalar_lea.sflag [#allocation3], %s210
          %s212 = sand.u32 %s28, 1
          %s213 = smul.addr %s212, 8
          %s214 = scalar_lea.vmem [#allocation2], %s213
          %216 = vsyncadd %s211, 0
          %s217 = smul.addr %s18, 8
          %s218 = scalar_lea.hbm %s0, %s217
          %s220 = sshll.u32 %s218, 4
          %s221 = int_to_ptr.hbm [resolvable:$true] %s220
          %s222 = sshll.u32 %s214, 4
          %s223 = int_to_ptr.vmem [resolvable:$true] %s222
          %225 = dma.hbm_to_vmem [thread:$0]  %s221, 128, %s223, %s211
        $region36: #{_mlp_pallas.1} parent=31 // pred_fallthru
          _
      $region32: #{_mlp_pallas.1} parent=5 // pred_fallthru
        _
      %p226 = scmp.le.s32.totalorder 1, %s18
      %p227 = scmp.lt.s32.totalorder %s18, 3
      %p228 = pnand %p226, %p227
      %p229 = pneg %p228
      // Predicated region
      $region37: #{_mlp_pallas.1} parent=5 // pred_check
        _
      $region38: #{_mlp_pallas.1} parent=5 // pred_check_branch
        %231 = sbr.rel (%p228) target = $region40
      $region39: #{_mlp_pallas.1} parent=5 // pred_region
        %s232 = ssub.s32 %s18, 1
        %s233 = sand.u32 %s31, 1
        %s234 = scalar_lea.sflag [#allocation3], %s233
        %s235 = sand.u32 %s31, 1
        %s236 = smul.addr %s235, 8
        %s237 = scalar_lea.vmem [#allocation2], %s236
        // Predicated region
        $region41: #{_mlp_pallas.1} parent=39 // pred_check
          %p238 = pneg %p44
        $region42: #{_mlp_pallas.1} parent=39 // pred_check_branch
          %240 = sbr.rel (%p238) target = $region44
        $region43: #{_mlp_pallas.1} parent=39 // pred_region
          %242 = dma.done %s234, 128
        $region44: #{_mlp_pallas.1} parent=39 // pred_fallthru
          _
        // Predicated region
        $region45: #{_mlp_pallas.1} parent=39 // pred_check
          %p243 = pneg %p65
        $region46: #{_mlp_pallas.1} parent=39 // pred_check_branch
          %245 = sbr.rel (%p243) target = $region48
        $region47: #{_mlp_pallas.1} parent=39 // pred_region
          %247 = dma.done [#allocation6], 2048
        $region48: #{_mlp_pallas.1} parent=39 // pred_fallthru
          _
        // Predicated region
        $region49: #{_mlp_pallas.1} parent=39 // pred_check
          %p248 = pneg %p107
        $region50: #{_mlp_pallas.1} parent=39 // pred_check_branch
          %250 = sbr.rel (%p248) target = $region52
        $region51: #{_mlp_pallas.1} parent=39 // pred_region
          %252 = dma.done [#allocation6], 2048
        $region52: #{_mlp_pallas.1} parent=39 // pred_fallthru
          _
        %s253 = sand.u32 %s31, 1
        %s254 = scalar_lea.sflag [#allocation3], %s253
        %s255 = sand.u32 %s31, 1
        %s256 = smul.addr %s255, 8
        %s257 = scalar_lea.vmem [#allocation2], %s256
        %p258 = pneg %p44
        %p259 = pneg %p41
        %p260 = pneg %p65
        %p261 = pneg %p62
        %p262 = pneg %p86
        %p263 = pneg %p83
        %p264 = pneg %p107
        %p265 = pneg %p104
        %p266 = pneg %p128
        %p267 = pneg %p125
        %p268 = pneg %p154
        %p269 = pneg %p151
        %s270 = sand.u32 %s141, 1
        %s271 = scalar_lea.sflag [#allocation4], %s270
        %s272 = sand.u32 %s141, 1
        %s273 = smul.addr %s272, 8
        %s274 = scalar_lea.vmem [#allocation8], %s273
        %v275 = vld [vmem:[%s237] sm:$0xff]
        %v276 = vld [vmem:[#allocation5] sm:$0xff]
        %v277 = vld [vmem:[#allocation5 + $0x8] sm:$0xff]
        %v278 = vld [vmem:[#allocation5 + $0x10] sm:$0xff]
        %v279 = vld [vmem:[#allocation5 + $0x18] sm:$0xff]
        %v280 = vld [vmem:[#allocation5 + $0x20] sm:$0xff]
        %v281 = vld [vmem:[#allocation5 + $0x28] sm:$0xff]
        %v282 = vld [vmem:[#allocation5 + $0x30] sm:$0xff]
        %v283 = vld [vmem:[#allocation5 + $0x38] sm:$0xff]
        %v284 = vld [vmem:[#allocation5 + $0x40] sm:$0xff]
        %v285 = vld [vmem:[#allocation5 + $0x48] sm:$0xff]
        %v286 = vld [vmem:[#allocation5 + $0x50] sm:$0xff]
        %v287 = vld [vmem:[#allocation5 + $0x58] sm:$0xff]
        %v288 = vld [vmem:[#allocation5 + $0x60] sm:$0xff]
        %v289 = vld [vmem:[#allocation5 + $0x68] sm:$0xff]
        %v290 = vld [vmem:[#allocation5 + $0x70] sm:$0xff]
        %v291 = vld [vmem:[#allocation5 + $0x78] sm:$0xff]
        %v292 = vld [vmem:[%s2] sm:$0x1]
        %v294 = vperm.slane %v292, 0
        %296 = vmatpush.msra.mxu0 %v291
        %297 = vmatpush.msra.mxu0 %v290
        %298 = vmatpush.msra.mxu0 %v289
        %299 = vmatpush.msra.mxu0 %v288
        %300 = vmatpush.msra.mxu0 %v287
        %301 = vmatpush.msra.mxu0 %v286
        %302 = vmatpush.msra.mxu0 %v285
        %303 = vmatpush.msra.mxu0 %v284
        %304 = vmatpush.msra.mxu0 %v283
        %305 = vmatpush.msra.mxu0 %v282
        %306 = vmatpush.msra.mxu0 %v281
        %307 = vmatpush.msra.mxu0 %v280
        %308 = vmatpush.msra.mxu0 %v279
        %309 = vmatpush.msra.mxu0 %v278
        %310 = vmatpush.msra.mxu0 %v277
        %311 = vmatpush.msra.mxu0 %v276
        %312 = vmatmul.f32.gmra.mxu0 %v275
        %v313 = vpop.f32.mrf.mxu0
        %v314 = vadd.f32 %v294, %v313
        %315 = vdwg.mxu0
        %v316 = vmul.f32 %v314, 0.5
        %v317 = vmul.f32 %v314, 0.70710677
        %v318 = vmul.f32 %v317, %v317
        %v319 = vmin.f32 16.0, %v318
        %v320 = vmul.f32 %v319, 2.1237322e-06
        %v321 = vadd.f32 %v320, 0.00028619796
        %v322 = vmul.f32 %v319, %v321
        %v323 = vadd.f32 %v322, 0.0036580483
        %v324 = vmul.f32 %v319, %v323
        %v325 = vadd.f32 %v324, 0.05243302
        %v326 = vmul.f32 %v319, %v325
        %v327 = vadd.f32 %v326, 0.18741608
        %v328 = vmul.f32 %v319, %v327
        %v329 = vadd.f32 %v328, 1.1283791
        %v330 = vmul.f32 %v317, %v329
        %v331 = vmul.f32 %v319, 3.8918573e-05
        %v332 = vadd.f32 %v331, 0.001143296
        %v333 = vmul.f32 %v319, %v332
        %v334 = vadd.f32 %v333, 0.014752088
        %v335 = vmul.f32 %v319, %v334
        %v336 = vadd.f32 %v335, 0.112945676
        %v337 = vmul.f32 %v319, %v336
        %v338 = vadd.f32 %v337, 0.4994258
        %v339 = vmul.f32 %v319, %v338
        %v340 = vadd.f32 %v339, 1.0
        %v341 = vrcp.pop %v340
        %v342 = vmul.f32 %v340, %v341
        %v343 = vsub.f32 1.0, %v342
        %v344 = vmul.f32 %v341, %v343
        %v345 = vadd.f32 %v341, %v344
        %vm346 = vweird.f32 %v340
        %vm347 = vweird.f32 %v341
        %vm348 = vmor %vm346, %vm347
        %v349 = vsel %vm348, %v341, %v345
        %v350 = vand.u32 2147483647, %v340
        %vm351 = vcmp.eq.f32.partialorder %v350, 8.507059e+37
        %v352 = vand.u32 %v340, 2147483648
        %v353 = vor.u32 1.1754944e-38, %v352
        %v354 = vsel %vm351, %v353, %v349
        %v355 = vmul.f32 %v330, %v354
        %v356 = vmin.f32 %v355, 1.0
        %v357 = vmax.f32 %v356, -1.0
        %v358 = vadd.f32 %v357, 1.0
        %v359 = vmul.f32 %v316, %v358
        %v360 = vld [vmem:[#allocation7] sm:$0xff]
        %v361 = vld [vmem:[#allocation7 + $0x8] sm:$0xff]
        %v362 = vld [vmem:[#allocation7 + $0x10] sm:$0xff]
        %v363 = vld [vmem:[#allocation7 + $0x18] sm:$0xff]
        %v364 = vld [vmem:[#allocation7 + $0x20] sm:$0xff]
        %v365 = vld [vmem:[#allocation7 + $0x28] sm:$0xff]
        %v366 = vld [vmem:[#allocation7 + $0x30] sm:$0xff]
        %v367 = vld [vmem:[#allocation7 + $0x38] sm:$0xff]
        %v368 = vld [vmem:[#allocation7 + $0x40] sm:$0xff]
        %v369 = vld [vmem:[#allocation7 + $0x48] sm:$0xff]
        %v370 = vld [vmem:[#allocation7 + $0x50] sm:$0xff]
        %v371 = vld [vmem:[#allocation7 + $0x58] sm:$0xff]
        %v372 = vld [vmem:[#allocation7 + $0x60] sm:$0xff]
        %v373 = vld [vmem:[#allocation7 + $0x68] sm:$0xff]
        %v374 = vld [vmem:[#allocation7 + $0x70] sm:$0xff]
        %v375 = vld [vmem:[#allocation7 + $0x78] sm:$0xff]
        %v376 = vld [vmem:[%s4] sm:$0x1]
        %v378 = vperm.slane %v376, 0
        %380 = vmatpush.msra.mxu0 %v375
        %381 = vmatpush.msra.mxu0 %v374
        %382 = vmatpush.msra.mxu0 %v373
        %383 = vmatpush.msra.mxu0 %v372
        %384 = vmatpush.msra.mxu0 %v371
        %385 = vmatpush.msra.mxu0 %v370
        %386 = vmatpush.msra.mxu0 %v369
        %387 = vmatpush.msra.mxu0 %v368
        %388 = vmatpush.msra.mxu0 %v367
        %389 = vmatpush.msra.mxu0 %v366
        %390 = vmatpush.msra.mxu0 %v365
        %391 = vmatpush.msra.mxu0 %v364
        %392 = vmatpush.msra.mxu0 %v363
        %393 = vmatpush.msra.mxu0 %v362
        %394 = vmatpush.msra.mxu0 %v361
        %395 = vmatpush.msra.mxu0 %v360
        %396 = vmatmul.f32.gmra.mxu0 %v359
        %v397 = vpop.f32.mrf.mxu0
        %v398 = vadd.f32 %v378, %v397
        %399 = vdwg.mxu0
        %400 = vst [vmem:[%s274] sm:$0xff] %v398
        %s401 = sand.u32 %s141, 1
        %s402 = scalar_lea.sflag [#allocation4], %s401
        %s403 = sand.u32 %s141, 1
        %s404 = smul.addr %s403, 8
        %s405 = scalar_lea.vmem [#allocation8], %s404
        // Predicated region
        $region53: #{_mlp_pallas.1} parent=39 // pred_check
          %p406 = pneg %p151
        $region54: #{_mlp_pallas.1} parent=39 // pred_check_branch
          %408 = sbr.rel (%p406) target = $region56
        $region55: #{_mlp_pallas.1} parent=39 // pred_region
          %410 = vsyncadd %s402, 0
          %s411 = smul.addr %s23, 8
          %s412 = scalar_lea.hbm %s5, %s411
          %s414 = sshll.u32 %s405, 4
          %s415 = int_to_ptr.vmem [resolvable:$true] %s414
          %s416 = sshll.u32 %s412, 4
          %s417 = int_to_ptr.hbm [resolvable:$true] %s416
          %419 = dma.vmem_to_hbm [thread:$0]  %s415, 128, %s417, %s402
        $region56: #{_mlp_pallas.1} parent=39 // pred_fallthru
          _
      $region40: #{_mlp_pallas.1} parent=5 // pred_fallthru
        _
      %p420 = scmp.le.s32.totalorder 2, %s18
      // Predicated region
      $region57: #{_mlp_pallas.1} parent=5 // pred_check
        %p421 = pneg %p420
      $region58: #{_mlp_pallas.1} parent=5 // pred_check_branch
        %423 = sbr.rel (%p421) target = $region60
      $region59: #{_mlp_pallas.1} parent=5 // pred_region
        %s424 = ssub.s32 %s18, 2
        // Predicated region
        $region61: #{_mlp_pallas.1} parent=59 // pred_check
          %p425 = pneg %p157
        $region62: #{_mlp_pallas.1} parent=59 // pred_check_branch
          %427 = sbr.rel (%p425) target = $region64
        $region63: #{_mlp_pallas.1} parent=59 // pred_region
          %s428 = sand.u32 %s142, 1
          %s429 = scalar_lea.sflag [#allocation4], %s428
          %s430 = sand.u32 %s142, 1
          %s431 = smul.addr %s430, 8
          %s432 = scalar_lea.vmem [#allocation8], %s431
          %434 = dma.done %s429, 128
        $region64: #{_mlp_pallas.1} parent=59 // pred_fallthru
          _
      $region60: #{_mlp_pallas.1} parent=5 // pred_fallthru
        _
    $region6: #{_mlp_pallas.1} parent=1 // loop_footer
      %s22 = sadd.s32 1, %s18
    $region7: #{_mlp_pallas.1} parent=1 // loop_footer_branch
      %17 = sbr.rel target = $region3
    $region8: #{_mlp_pallas.1} parent=1 // loop_exit
      _
    %435 = vsyncpa [#allocation3], 1
    %s436 = scalar_lea.sflag [#allocation3], 1
    %437 = vsyncpa %s436, 1
    %438 = vsyncpa [#allocation6], 1
    %439 = vsyncpa [#allocation4], 1
    %s440 = scalar_lea.sflag [#allocation4], 1
    %441 = vsyncpa %s440, 1

</llo_original>
